<compile_context>
chip_gen: v5e
topology: v5e:2x2
jax: 0.10.0
libtpu: 0.0.40
codegen_flags: <defaults>
</compile_context>

<pallas_src>
import jax
import jax.numpy as jnp
from jax.experimental import pallas as pl
from jax.experimental.pallas import tpu as pltpu

OTHER = 1.0  # the module's `other` scalar


def linear_add_kernel(x_ref, w_ref, b_ref, o_ref):
    x = x_ref[...]          # (B, IN)
    w = w_ref[...]          # (IN, OUT) — pre-transposed once at prep time
    b = b_ref[...]          # (1, OUT)  — already includes the `other` scalar
    y = jnp.dot(x, w, preferred_element_type=jnp.float32)   # clean MN MXU push
    o_ref[...] = (y + b).astype(o_ref.dtype)


def prepare_params(weight, bias, other=OTHER):
    """One-time parameter prep.

    weight: (OUT, IN) PyTorch Linear layout -> returns (IN, OUT) transposed.
    bias:   (OUT,)    -> returns (1, OUT) with `other` folded in.
    """
    out_features = weight.shape[0]
    w_t = jnp.asarray(weight).T                       # (IN, OUT), done once
    bias_eff = (jnp.asarray(bias) + other).reshape(1, out_features)
    return w_t, bias_eff


def linear_add(x, w_t, bias_eff):
    """Equivalent of: nn.Linear(10, 5)(x) + other.

    x:        (B, IN)    float32
    w_t:      (IN, OUT)  float32  (pre-transposed weight)
    bias_eff: (1, OUT)   float32  (bias + other, prepared once)
    returns   (B, OUT)   float32
    """
    B, IN = x.shape
    OUT = w_t.shape[1]
    vmem = pl.BlockSpec(memory_space=pltpu.MemorySpace.VMEM)
    cost = pl.CostEstimate(
        flops=2 * B * IN * OUT,
        transcendentals=0,
        bytes_accessed=4 * (B * IN + IN * OUT + OUT + B * OUT),
    )
    return pl.pallas_call(
        linear_add_kernel,
        out_shape=jax.ShapeDtypeStruct((B, OUT), jnp.float32),
        in_specs=[vmem, vmem, vmem],
        out_specs=vmem,
        cost_estimate=cost,
    )(x, w_t, bias_eff)


if __name__ == "__main__":
    key = jax.random.PRNGKey(0)
    kx, kw, kb = jax.random.split(key, 3)

    # Module shapes: Linear(10, 5), input x1 = (10, 10)
    B, IN, OUT = 10, 10, 5
    x1 = jax.random.normal(kx, (B, IN), dtype=jnp.float32)
    # Deterministic parameter init (uniform like PyTorch's default, seeded).
    bound = 1.0 / (IN ** 0.5)
    weight = jax.random.uniform(kw, (OUT, IN), jnp.float32, -bound, bound)
    bias = jax.random.uniform(kb, (OUT,), jnp.float32, -bound, bound)

    # One-time parameter prep (transpose weight, fold `other` into bias).
    w_t, bias_eff = prepare_params(weight, bias, OTHER)

    out = linear_add(x1, w_t, bias_eff)
    jax.block_until_ready(out)

    # Reference check in plain JAX (against original PyTorch-layout params).
    ref = x1 @ weight.T + bias + OTHER
    assert out.shape == (B, OUT)
    assert jnp.allclose(out, ref, atol=1e-5), "mismatch vs reference"
    print("KERNEL_OK")
</pallas_src>

<mosaic_0001>
module attributes {stable_mosaic.version = 11 : i64} {
  func.func @linear_add_kernel(%arg0: memref<10x10xf32, #tpu.memory_space<vmem>>, %arg1: memref<10x5xf32, #tpu.memory_space<vmem>>, %arg2: memref<1x5xf32, #tpu.memory_space<vmem>>, %arg3: memref<10x5xf32, #tpu.memory_space<vmem>>) attributes {dimension_semantics = [], scalar_prefetch = 0 : i64, scratch_operands = 0 : i64, tpu.core_type = #tpu.core_type<tc>} {
    %c0 = arith.constant 0 : index
    %c0_0 = arith.constant 0 : index
    %0 = vector.load %arg0[%c0, %c0_0] : memref<10x10xf32, #tpu.memory_space<vmem>>, vector<10x10xf32>
    %c0_1 = arith.constant 0 : index
    %c0_2 = arith.constant 0 : index
    %1 = vector.load %arg1[%c0_1, %c0_2] : memref<10x5xf32, #tpu.memory_space<vmem>>, vector<10x5xf32>
    %c0_3 = arith.constant 0 : index
    %c0_4 = arith.constant 0 : index
    %2 = vector.load %arg2[%c0_3, %c0_4] : memref<1x5xf32, #tpu.memory_space<vmem>>, vector<1x5xf32>
    %cst = arith.constant dense<0.000000e+00> : vector<10x5xf32>
    %3 = tpu.matmul %0, %1, %cst {dimension_numbers = #tpu.dot_dimension_numbers<[1], [0], [0], [1], [0, 0, 1, 1], [], []>} : vector<10x10xf32>, vector<10x5xf32>, vector<10x5xf32> -> vector<10x5xf32>
    %4 = vector.broadcast %2 : vector<1x5xf32> to vector<10x5xf32>
    %5 = arith.addf %3, %4 : vector<10x5xf32>
    %c0_5 = arith.constant 0 : index
    %c0_6 = arith.constant 0 : index
    %6 = vector.load %arg3[%c0_5, %c0_6] : memref<10x5xf32, #tpu.memory_space<vmem>>, vector<10x5xf32>
    tpu.vector_store %arg3[%c0_5, %c0_6], %5 {strides = array<i32>} : memref<10x5xf32, #tpu.memory_space<vmem>>, vector<10x5xf32>,
    return
  }
}

</mosaic_0001>

<llo_original>
// kernel: tpu_custom_call.1
$region0: #{tpu_custom_call.1}
  #allocation0 [shape = 'u32[]', space=smem, size = 0x4, offset = 0x4, fixed_abs, tag = 'smem constant byte address 0x4 - core index']
  #allocation1 [shape = 'u32[72,128]{1,0:T(1,128)}', space=vmem, size = 0x9000, scoped, tag = 'internal scratch']
  %s0 = inlined_call_operand.vmem [shape: f32[10,10], index: 0, kind: input, shape index: {}]
  %s1 = inlined_call_operand.vmem [shape: f32[10,5], index: 1, kind: input, shape index: {}]
  %s2 = inlined_call_operand.vmem [shape: f32[1,5], index: 2, kind: input, shape index: {}]
  %s3 = inlined_call_operand.vmem [shape: f32[10,5], index: 3, kind: output, shape index: {}]
  %s4 = sld [smem:[#allocation0]]
  $region22: #{tpu_custom_call.1} parent=0
    _
  %s6 = ssub.s32 1, %s4
  %s7 = scalar_select 0, %s6, %s4
  // Predicated region
  $region2: #{tpu_custom_call.1} parent=0 // pred_check
    _
  $region3: #{tpu_custom_call.1} parent=0 // pred_check_branch
    %9 = sbr.rel (0) target = $region5
  $region4: #{tpu_custom_call.1} parent=0 // pred_region
    _
  $region5: #{tpu_custom_call.1} parent=0 // pred_fallthru
    _
  // Predicated region
  $region6: #{tpu_custom_call.1} parent=0 // pred_check
    _
  $region7: #{tpu_custom_call.1} parent=0 // pred_check_branch
    %11 = sbr.rel (0) target = $region9
  $region8: #{tpu_custom_call.1} parent=0 // pred_region
    _
  $region9: #{tpu_custom_call.1} parent=0 // pred_fallthru
    _
  // Predicated region
  $region10: #{tpu_custom_call.1} parent=0 // pred_check
    _
  $region11: #{tpu_custom_call.1} parent=0 // pred_check_branch
    %13 = sbr.rel (0) target = $region13
  $region12: #{tpu_custom_call.1} parent=0 // pred_region
    _
  $region13: #{tpu_custom_call.1} parent=0 // pred_fallthru
    _
  %v14 = vld [vmem:[%s0] sm:$0xff]
  %v15 = vld [vmem:[%s0 + $0x8] sm:$0x3]
  %v16 = vld [vmem:[%s1] sm:$0xff]
  %v17 = vld [vmem:[%s1 + $0x8] sm:$0x3]
  %v18 = vld [vmem:[%s2] sm:$0x1]
  %v20 = vperm.slane %v18, 0
  %vm22 = vcmask 80896
  %v24 = vsel %vm22, %v14, 0
  %v27 = vsel %vm22, %v15, 0
  %vm29 = vcmask 1041408
  %v31 = vsel %vm29, %v17, 0
  %33 = vmatpush.msra.mxu0 0.0
  %34 = vmatpush.msra.mxu0 0.0
  %35 = vmatpush.msra.mxu0 0.0
  %36 = vmatpush.msra.mxu0 0.0
  %37 = vmatpush.msra.mxu0 0.0
  %38 = vmatpush.msra.mxu0 0.0
  %39 = vmatpush.msra.mxu0 0.0
  %40 = vmatpush.msra.mxu0 0.0
  %41 = vmatpush.msra.mxu0 0.0
  %42 = vmatpush.msra.mxu0 0.0
  %43 = vmatpush.msra.mxu0 0.0
  %44 = vmatpush.msra.mxu0 0.0
  %45 = vmatpush.msra.mxu0 0.0
  %46 = vmatpush.msra.mxu0 0.0
  %47 = vmatpush.msra.mxu0 %v31
  %48 = vmatpush.msra.mxu0 %v16
  %49 = vmatmul.f32.gmra.mxu0 %v24
  %v50 = vpop.f32.mrf.mxu0
  %v51 = vadd.f32 %v20, %v50
  %52 = vmatmul.f32.gmra.mxu0 %v27
  %v53 = vpop.f32.mrf.mxu0
  %v54 = vadd.f32 %v20, %v53
  %55 = vdwg.mxu0
  %vm56 = vcmask 39936
  %57 = vst.msk [vmem:[%s3] sm:$0xff] %vm56, %v51
  %vm58 = vcmask 33792
  %59 = vst.msk [vmem:[%s3 + $0x8] sm:$0x3] %vm58, %v54
  // Predicated region
  $region14: #{tpu_custom_call.1} parent=0 // pred_check
    _
  $region15: #{tpu_custom_call.1} parent=0 // pred_check_branch
    %61 = sbr.rel (0) target = $region17
  $region16: #{tpu_custom_call.1} parent=0 // pred_region
    _
  $region17: #{tpu_custom_call.1} parent=0 // pred_fallthru
    _
  // Predicated region
  $region18: #{tpu_custom_call.1} parent=0 // pred_check
    _
  $region19: #{tpu_custom_call.1} parent=0 // pred_check_branch
    %63 = sbr.rel (0) target = $region21
  $region20: #{tpu_custom_call.1} parent=0 // pred_region
    _
  $region21: #{tpu_custom_call.1} parent=0 // pred_fallthru
    _

</llo_original>
